<compile_context>
chip_gen: v5e
topology: v5e:2x2
jax: 0.10.0
libtpu: 0.0.40
codegen_flags: <defaults>
</compile_context>

<pallas_src>
import jax
import jax.numpy as jnp
from jax.experimental import pallas as pl
from jax.experimental.pallas import tpu as pltpu

N_MODELS = 3
HIDDEN = 32
HPAD = 128      # fused hidden width: N_MODELS*HIDDEN = 96 padded to lane-dense 128
OUTPAD = 128    # lane-dense output tile; real model outputs live in lanes [0, N_MODELS)


def _round_up(x, m):
    return (x + m - 1) // m * m


def design_wrapper_kernel(x_ref, w1_ref, b1_ref, w2_ref, b2_ref, out_ref, acc_ref):
    # x_ref  : (tb, tk)        streamed input tile
    # w1_ref : (tk, HPAD)      fused first-layer weights (all heads side by side)
    # b1_ref : (1, HPAD)       fused first-layer bias (resident)
    # w2_ref : (HPAD, OUTPAD)  block-structured second layer (resident)
    # b2_ref : (1, OUTPAD)     second-layer bias (resident)
    # out_ref: (tb, OUTPAD)    lane-dense output tile
    # acc_ref: (tb, HPAD) f32  accumulator across the D (reduction) grid axis
    k = pl.program_id(1)

    @pl.when(k == 0)
    def _init():
        # Fold the first-layer bias into the accumulator init: the steady-state
        # body of the K loop is then a single fused MXU matmul.
        acc_ref[...] = jnp.broadcast_to(b1_ref[...], acc_ref.shape)

    # One fused MXU matmul for all heads on this K tile.
    acc_ref[...] += jnp.dot(x_ref[...], w1_ref[...],
                            preferred_element_type=jnp.float32)

    @pl.when(k == pl.num_programs(1) - 1)
    def _finalize():
        h = jnp.maximum(acc_ref[...], 0.0)                         # (tb, HPAD) f32
        # Second layer fused across heads: column m of w2_ref holds model m's
        # (HIDDEN,) weights in rows [m*HIDDEN, (m+1)*HIDDEN); everything else 0.
        # -> lanes 0..N_MODELS-1 of y are exactly torch.cat([...], dim=-1).
        y = jnp.dot(h, w2_ref[...], preferred_element_type=jnp.float32) + b2_ref[...]
        out_ref[...] = y.astype(out_ref.dtype)


def _fuse_and_pad_params(params, compute_dtype):
    """Fuse per-model weights into lane-dense slabs the kernel consumes."""
    w1, b1, w2, b2 = params
    n, d, h = w1.shape
    assert n * h <= HPAD and n <= OUTPAD

    # First layer: (N, D, H) -> (D, N*H), zero-pad to (D, HPAD).
    w1_f = jnp.transpose(w1, (1, 0, 2)).reshape(d, n * h)
    b1_f = b1.reshape(1, n * h)
    w1_f = jnp.pad(w1_f, ((0, 0), (0, HPAD - n * h)))
    b1_f = jnp.pad(b1_f, ((0, 0), (0, HPAD - n * h)))

    # Second layer: block-structured (HPAD, OUTPAD) so one matmul emits the
    # concatenated per-model outputs into lanes 0..n-1 (built vectorized, no
    # host loop of .at[].set).
    vals = jnp.pad(w2.reshape(n * h).astype(jnp.float32), (0, HPAD - n * h))
    row = jnp.arange(HPAD)
    col = jnp.arange(OUTPAD)
    mask = (row[:, None] < n * h) & (col[None, :] == (row[:, None] // h))
    w2_big = jnp.where(mask, vals[:, None], 0.0)                    # (HPAD, OUTPAD)
    b2_f = jnp.pad(b2.reshape(1, n).astype(jnp.float32),
                   ((0, 0), (0, OUTPAD - n)))

    # Only the bandwidth-heavy streamed operand gets the low-precision cast;
    # biases and the tiny second layer stay f32 (keeps v5e's f32-only VPU happy).
    return w1_f.astype(compute_dtype), b1_f.astype(jnp.float32), w2_big, b2_f


def design_wrapper_forward(x_nchw, params, *, compute_dtype=jnp.float32,
                           tb=None, tk=None):
    """torch.cat([model(X) for model in models], dim=-1) as one Pallas call."""
    w1, _, _, _ = params
    n_models, d, _ = w1.shape
    B = x_nchw.shape[0]
    x_flat = x_nchw.reshape(B, -1).astype(compute_dtype)

    # Adaptive tiling: batch tile tracks B (sublane-multiple, capped so the
    # "parallel" axis still has several programs for huge B); K tiles are near
    # even lane-multiple splits of D with minimal padding.
    if tb is None:
        tb = min(512, _round_up(B, 8))
    d_lane = _round_up(d, 128)
    if tk is None:
        max_tk = 1024
        nk = -(-d_lane // max_tk)                 # ceil-div
        tk = _round_up(-(-d_lane // nk), 128)     # near-even, lane-multiple
    b_pad = _round_up(B, tb)
    d_pad = _round_up(d_lane, tk)
    x_flat = jnp.pad(x_flat, ((0, b_pad - B), (0, d_pad - d)))

    w1_f, b1_f, w2_big, b2_f = _fuse_and_pad_params(params, compute_dtype)
    w1_f = jnp.pad(w1_f, ((0, d_pad - d), (0, 0)))

    grid = (b_pad // tb, d_pad // tk)   # reduction (D) axis last

    itemsize = jnp.dtype(compute_dtype).itemsize
    # Double-buffered streamed tiles + resident weights + output + accumulator;
    # clamped so the scoped limit stays safe on every chip (v5e/v6e/v7x).
    vmem_bytes = (2 * (tb * tk + tk * HPAD) * itemsize
                  + 2 * (HPAD + HPAD * OUTPAD + OUTPAD) * 4
                  + 2 * tb * OUTPAD * 4 + tb * HPAD * 4)
    vmem_limit = int(min(32 * 1024 * 1024, max(8 * 1024 * 1024, 4 * vmem_bytes)))

    cost = pl.CostEstimate(
        flops=2 * b_pad * d_pad * HPAD + 2 * b_pad * HPAD * OUTPAD,
        transcendentals=0,
        bytes_accessed=(x_flat.size * itemsize + w1_f.size * itemsize
                        + (w2_big.size + b1_f.size + b2_f.size) * 4
                        + b_pad * OUTPAD * 4),
    )

    out_padded = pl.pallas_call(
        design_wrapper_kernel,
        out_shape=jax.ShapeDtypeStruct((b_pad, OUTPAD), jnp.float32),
        grid_spec=pltpu.PrefetchScalarGridSpec(
            num_scalar_prefetch=0,
            grid=grid,
            in_specs=[
                pl.BlockSpec((tb, tk), lambda i, k: (i, k)),        # x tile
                pl.BlockSpec((tk, HPAD), lambda i, k: (k, 0)),      # fused W1 tile
                pl.BlockSpec((1, HPAD), lambda i, k: (0, 0)),       # fused b1 (resident)
                pl.BlockSpec((HPAD, OUTPAD), lambda i, k: (0, 0)),  # fused W2 (resident)
                pl.BlockSpec((1, OUTPAD), lambda i, k: (0, 0)),     # fused b2 (resident)
            ],
            out_specs=pl.BlockSpec((tb, OUTPAD), lambda i, k: (i, 0)),
            scratch_shapes=[pltpu.VMEM((tb, HPAD), jnp.float32)],
        ),
        compiler_params=pltpu.CompilerParams(
            dimension_semantics=("parallel", "arbitrary"),
            vmem_limit_bytes=vmem_limit,
        ),
        cost_estimate=cost,
    )(x_flat, w1_f, b1_f, w2_big, b2_f)

    # Strip batch / lane padding: (B, N_MODELS) == torch.cat semantics.
    return out_padded[:B, :n_models]


def make_params(key, d, hidden=HIDDEN, n_models=N_MODELS):
    k1, k2, k3, k4 = jax.random.split(key, 4)
    w1 = jax.random.normal(k1, (n_models, d, hidden), jnp.float32) * 0.02
    b1 = jax.random.normal(k2, (n_models, 1, hidden), jnp.float32) * 0.01
    w2 = jax.random.normal(k3, (n_models, hidden, 1), jnp.float32) * 0.1
    b2 = jax.random.normal(k4, (n_models, 1, 1), jnp.float32) * 0.01
    return w1, b1, w2, b2


def reference_forward(x_nchw, params):
    """Pure-JAX reference mirroring DesignWrapper.forward semantics."""
    w1, b1, w2, b2 = params
    B = x_nchw.shape[0]
    x = x_nchw.reshape(B, -1).astype(jnp.float32)
    outs = []
    for m in range(N_MODELS):
        h = jnp.maximum(x @ w1[m] + b1[m], 0.0)
        outs.append(h @ w2[m] + b2[m])  # (B, 1)
    return jnp.concatenate(outs, axis=-1)  # (B, N_MODELS)


if __name__ == "__main__":
    key = jax.random.PRNGKey(0)
    kx, kp = jax.random.split(key)

    B, C, Himg, Wimg = 2, 4, 16, 16
    x = jax.random.normal(kx, (B, C, Himg, Wimg), jnp.float32)  # NCHW like PyTorch
    params = make_params(kp, d=C * Himg * Wimg)

    ref = reference_forward(x, params)

    # f32 path: bit-for-bit semantics of the original module (tight check).
    out = jax.block_until_ready(design_wrapper_forward(x, params))
    assert out.shape == (B, N_MODELS), out.shape
    assert jnp.allclose(out, ref, atol=2e-4, rtol=2e-4), (out, ref)

    # bf16 streamed-operand path (halves weight/activation HBM traffic on
    # v6e/v7x; f32 accumulation keeps the error small).
    out_bf16 = jax.block_until_ready(
        design_wrapper_forward(x, params, compute_dtype=jnp.bfloat16))
    assert out_bf16.shape == (B, N_MODELS), out_bf16.shape
    assert jnp.allclose(out_bf16, ref, atol=5e-2, rtol=5e-2), (out_bf16, ref)

    print("KERNEL_OK")
</pallas_src>

<mosaic_0001>
module attributes {stable_mosaic.version = 11 : i64} {
  func.func @design_wrapper_kernel(%arg0: i32, %arg1: i32, %arg2: memref<8x1024xf32, #tpu.memory_space<vmem>>, %arg3: memref<1024x128xf32, #tpu.memory_space<vmem>>, %arg4: memref<1x128xf32, #tpu.memory_space<vmem>>, %arg5: memref<128x128xf32, #tpu.memory_space<vmem>>, %arg6: memref<1x128xf32, #tpu.memory_space<vmem>>, %arg7: memref<8x128xf32, #tpu.memory_space<vmem>>, %arg8: memref<8x128xf32, #tpu.memory_space<vmem>>) attributes {dimension_semantics = [#tpu.dimension_semantics<parallel>, #tpu.dimension_semantics<arbitrary>], iteration_bounds = array<i64: 1, 1>, scalar_prefetch = 0 : i64, scratch_operands = 1 : i64, tpu.core_type = #tpu.core_type<tc>, window_params = [{transform_indices = @transform_0, window_bounds = array<i64: 8, 1024>}, {transform_indices = @transform_1, window_bounds = array<i64: 1024, 128>}, {pipeline_mode = #tpu.pipeline_mode<synchronous>, transform_indices = @transform_2, window_bounds = array<i64: 1, 128>}, {pipeline_mode = #tpu.pipeline_mode<synchronous>, transform_indices = @transform_3, window_bounds = array<i64: 128, 128>}, {pipeline_mode = #tpu.pipeline_mode<synchronous>, transform_indices = @transform_4, window_bounds = array<i64: 1, 128>}, {transform_indices = @transform_5, window_bounds = array<i64: 8, 128>}]} {
    %c0_i32 = arith.constant 0 : i32
    %0 = arith.cmpi eq, %arg1, %c0_i32 : i32
    %1 = arith.extui %0 : i1 to i32
    %c0_i32_0 = arith.constant 0 : i32
    %2 = arith.cmpi ne, %1, %c0_i32_0 : i32
    scf.if %2 {
      %c0_10 = arith.constant 0 : index
      %c0_11 = arith.constant 0 : index
      %12 = vector.load %arg4[%c0_10, %c0_11] : memref<1x128xf32, #tpu.memory_space<vmem>>, vector<1x128xf32>
      %13 = vector.shape_cast %12 : vector<1x128xf32> to vector<1x128xf32>
      %14 = vector.broadcast %13 : vector<1x128xf32> to vector<8x128xf32>
      %c0_12 = arith.constant 0 : index
      %c0_13 = arith.constant 0 : index
      %15 = vector.load %arg8[%c0_12, %c0_13] : memref<8x128xf32, #tpu.memory_space<vmem>>, vector<8x128xf32>
      tpu.vector_store %arg8[%c0_12, %c0_13], %14 {strides = array<i32>} : memref<8x128xf32, #tpu.memory_space<vmem>>, vector<8x128xf32>,
    } else {
    }
    %c0 = arith.constant 0 : index
    %c0_1 = arith.constant 0 : index
    %3 = vector.load %arg8[%c0, %c0_1] : memref<8x128xf32, #tpu.memory_space<vmem>>, vector<8x128xf32>
    %c0_2 = arith.constant 0 : index
    %c0_3 = arith.constant 0 : index
    %4 = vector.load %arg2[%c0_2, %c0_3] : memref<8x1024xf32, #tpu.memory_space<vmem>>, vector<8x1024xf32>
    %c0_4 = arith.constant 0 : index
    %c0_5 = arith.constant 0 : index
    %5 = vector.load %arg3[%c0_4, %c0_5] : memref<1024x128xf32, #tpu.memory_space<vmem>>, vector<1024x128xf32>
    %cst = arith.constant dense<0.000000e+00> : vector<8x128xf32>
    %6 = tpu.matmul %4, %5, %cst {dimension_numbers = #tpu.dot_dimension_numbers<[1], [0], [0], [1], [0, 0, 1, 1], [], []>} : vector<8x1024xf32>, vector<1024x128xf32>, vector<8x128xf32> -> vector<8x128xf32>
    %7 = arith.addf %3, %6 : vector<8x128xf32>
    %c0_6 = arith.constant 0 : index
    %c0_7 = arith.constant 0 : index
    %8 = vector.load %arg8[%c0_6, %c0_7] : memref<8x128xf32, #tpu.memory_space<vmem>>, vector<8x128xf32>
    tpu.vector_store %arg8[%c0_6, %c0_7], %7 {strides = array<i32>} : memref<8x128xf32, #tpu.memory_space<vmem>>, vector<8x128xf32>,
    %c0_i32_8 = arith.constant 0 : i32
    %9 = arith.cmpi eq, %arg1, %c0_i32_8 : i32
    %10 = arith.extui %9 : i1 to i32
    %c0_i32_9 = arith.constant 0 : i32
    %11 = arith.cmpi ne, %10, %c0_i32_9 : i32
    scf.if %11 {
      %c0_10 = arith.constant 0 : index
      %c0_11 = arith.constant 0 : index
      %12 = vector.load %arg8[%c0_10, %c0_11] : memref<8x128xf32, #tpu.memory_space<vmem>>, vector<8x128xf32>
      %cst_12 = arith.constant 0.000000e+00 : f32
      %13 = vector.broadcast %cst_12 : f32 to vector<8x128xf32>
      %14 = arith.maximumf %12, %13 : vector<8x128xf32>
      %c0_13 = arith.constant 0 : index
      %c0_14 = arith.constant 0 : index
      %15 = vector.load %arg5[%c0_13, %c0_14] : memref<128x128xf32, #tpu.memory_space<vmem>>, vector<128x128xf32>
      %cst_15 = arith.constant dense<0.000000e+00> : vector<8x128xf32>
      %16 = tpu.matmul %14, %15, %cst_15 {dimension_numbers = #tpu.dot_dimension_numbers<[1], [0], [0], [1], [0, 0, 1, 1], [], []>} : vector<8x128xf32>, vector<128x128xf32>, vector<8x128xf32> -> vector<8x128xf32>
      %c0_16 = arith.constant 0 : index
      %c0_17 = arith.constant 0 : index
      %17 = vector.load %arg6[%c0_16, %c0_17] : memref<1x128xf32, #tpu.memory_space<vmem>>, vector<1x128xf32>
      %18 = vector.broadcast %17 : vector<1x128xf32> to vector<8x128xf32>
      %19 = arith.addf %16, %18 : vector<8x128xf32>
      %c0_18 = arith.constant 0 : index
      %c0_19 = arith.constant 0 : index
      %20 = vector.load %arg7[%c0_18, %c0_19] : memref<8x128xf32, #tpu.memory_space<vmem>>, vector<8x128xf32>
      tpu.vector_store %arg7[%c0_18, %c0_19], %19 {strides = array<i32>} : memref<8x128xf32, #tpu.memory_space<vmem>>, vector<8x128xf32>,
    } else {
    }
    return
  }
  func.func @transform_0(%arg0: i32, %arg1: i32) -> (i32, i32) {
    %c0_i32 = arith.constant 0 : i32
    return %arg0, %arg1 : i32, i32
  }
  func.func @transform_1(%arg0: i32, %arg1: i32) -> (i32, i32) {
    %c0_i32 = arith.constant 0 : i32
    %c0_i32_0 = arith.constant 0 : i32
    return %arg1, %c0_i32 : i32, i32
  }
  func.func @transform_2(%arg0: i32, %arg1: i32) -> (i32, i32) {
    %c0_i32 = arith.constant 0 : i32
    %c0_i32_0 = arith.constant 0 : i32
    %c0_i32_1 = arith.constant 0 : i32
    return %c0_i32, %c0_i32_0 : i32, i32
  }
  func.func @transform_3(%arg0: i32, %arg1: i32) -> (i32, i32) {
    %c0_i32 = arith.constant 0 : i32
    %c0_i32_0 = arith.constant 0 : i32
    %c0_i32_1 = arith.constant 0 : i32
    return %c0_i32, %c0_i32_0 : i32, i32
  }
  func.func @transform_4(%arg0: i32, %arg1: i32) -> (i32, i32) {
    %c0_i32 = arith.constant 0 : i32
    %c0_i32_0 = arith.constant 0 : i32
    %c0_i32_1 = arith.constant 0 : i32
    return %c0_i32, %c0_i32_0 : i32, i32
  }
  func.func @transform_5(%arg0: i32, %arg1: i32) -> (i32, i32) {
    %c0_i32 = arith.constant 0 : i32
    %c0_i32_0 = arith.constant 0 : i32
    return %arg0, %c0_i32 : i32, i32
  }
}

</mosaic_0001>

<llo_original>
// kernel: tpu_custom_call.1
$region0: #{tpu_custom_call.1}
  #allocation0 [shape = 'u32[]', space=smem, size = 0x4, offset = 0x4, fixed_abs, tag = 'smem constant byte address 0x4 - core index']
  #allocation1 [shape = 'u32[72,128]{1,0:T(1,128)}', space=vmem, size = 0x9000, scoped, tag = 'internal scratch']
  #allocation2 [shape = 'f32[8,128]{1,0:T(8,128)}', space=vmem, size = 0x1000, scoped, tag = 'scratch operand']
  %s0 = inlined_call_operand.hbm [shape: f32[8,1024], index: 0, kind: input, shape index: {}]
  %s1 = inlined_call_operand.hbm [shape: f32[1024,128], index: 1, kind: input, shape index: {}]
  %s2 = inlined_call_operand.vmem [shape: f32[1,128], index: 2, kind: input, shape index: {}]
  %s3 = inlined_call_operand.hbm [shape: f32[128,128], index: 3, kind: input, shape index: {}]
  %s4 = inlined_call_operand.vmem [shape: f32[1,128], index: 4, kind: input, shape index: {}]
  %s5 = inlined_call_operand.hbm [shape: f32[8,128], index: 5, kind: output, shape index: {}]
  %s6 = sld [smem:[#allocation0]]
  $region50: #{tpu_custom_call.1} parent=0
    _
  %s8 = ssub.s32 1, %s6
  %s9 = scalar_select 0, %s8, %s6
  $region1: #{tpu_custom_call.1} parent=0
    #allocation3 [shape = 'u8[32768]{0}', space=vmem, size = 0x8000, scoped, tag = 'input window, operand 0, single buffered']
    #allocation4 [shape = 's32[1]{0}', space=sflag, size = 0x4, scoped, tag = 'scoped memory for tpu_custom_call.1']
    #allocation5 [shape = 's32[1]{0}', space=sflag, size = 0x4, scoped, tag = 'scoped memory for tpu_custom_call.1']
    #allocation6 [shape = 'u8[524288]{0}', space=vmem, size = 0x80000, scoped, tag = 'input window, operand 1, single buffered']
    #allocation7 [shape = 's32[1]{0}', space=sflag, size = 0x4, scoped, tag = 'scoped memory for tpu_custom_call.1']
    #allocation8 [shape = 'u8[65536]{0}', space=vmem, size = 0x10000, scoped, tag = 'input window, operand 3, single buffered']
    #allocation9 [shape = 'u8[4096]{0}', space=vmem, size = 0x1000, scoped, tag = 'output window, operand 0, single buffered']
    %10 = vsyncpa [#allocation4], 0
    %11 = vsyncpa [#allocation7], 0
    %12 = vsyncpa [#allocation5], 0
    // Predicated region
    $region2: #{tpu_custom_call.1} parent=1 // pred_check
      _
    $region3: #{tpu_custom_call.1} parent=1 // pred_check_branch
      %14 = sbr.rel (0) target = $region5
    $region4: #{tpu_custom_call.1} parent=1 // pred_region
      %16 = vsyncadd [#allocation4], 0
      %s18 = sshll.u32 %s0, 4
      %s19 = int_to_ptr.hbm [resolvable:$true] %s18
      %s20 = sshll.u32 [#allocation3], 4
      %s21 = int_to_ptr.vmem [resolvable:$true] %s20
      %23 = dma.hbm_to_vmem [thread:$0]  %s19, 1024, %s21, [#allocation4]
    $region5: #{tpu_custom_call.1} parent=1 // pred_fallthru
      _
    // Predicated region
    $region6: #{tpu_custom_call.1} parent=1 // pred_check
      _
    $region7: #{tpu_custom_call.1} parent=1 // pred_check_branch
      %25 = sbr.rel (0) target = $region9
    $region8: #{tpu_custom_call.1} parent=1 // pred_region
      %27 = vsyncadd [#allocation7], 0
      %s28 = sshll.u32 %s1, 4
      %s29 = int_to_ptr.hbm [resolvable:$true] %s28
      %s30 = sshll.u32 [#allocation6], 4
      %s31 = int_to_ptr.vmem [resolvable:$true] %s30
      %36 = dma.hbm_to_vmem [thread:$0]  %s29, 16384, %s31, [#allocation7], 128, 128, 8
    $region9: #{tpu_custom_call.1} parent=1 // pred_fallthru
      _
    // Predicated region
    $region10: #{tpu_custom_call.1} parent=1 // pred_check
      _
    $region11: #{tpu_custom_call.1} parent=1 // pred_check_branch
      %38 = sbr.rel (0) target = $region13
    $region12: #{tpu_custom_call.1} parent=1 // pred_region
      _
    $region13: #{tpu_custom_call.1} parent=1 // pred_fallthru
      _
    // Predicated region
    $region14: #{tpu_custom_call.1} parent=1 // pred_check
      _
    $region15: #{tpu_custom_call.1} parent=1 // pred_check_branch
      %40 = sbr.rel (0) target = $region17
    $region16: #{tpu_custom_call.1} parent=1 // pred_region
      %42 = vsyncadd [#allocation7], 0
      %s43 = sshll.u32 %s3, 4
      %s44 = int_to_ptr.hbm [resolvable:$true] %s43
      %s45 = sshll.u32 [#allocation8], 4
      %s46 = int_to_ptr.vmem [resolvable:$true] %s45
      %51 = dma.hbm_to_vmem [thread:$0]  %s44, 2048, %s46, [#allocation7], 128, 128, 8
    $region17: #{tpu_custom_call.1} parent=1 // pred_fallthru
      _
    // Predicated region
    $region18: #{tpu_custom_call.1} parent=1 // pred_check
      _
    $region19: #{tpu_custom_call.1} parent=1 // pred_check_branch
      %53 = sbr.rel (0) target = $region21
    $region20: #{tpu_custom_call.1} parent=1 // pred_region
      _
    $region21: #{tpu_custom_call.1} parent=1 // pred_fallthru
      _
    // Predicated region
    $region22: #{tpu_custom_call.1} parent=1 // pred_check
      _
    $region23: #{tpu_custom_call.1} parent=1 // pred_check_branch
      %55 = sbr.rel (0) target = $region25
    $region24: #{tpu_custom_call.1} parent=1 // pred_region
      %57 = dma.done [#allocation4], 1024
    $region25: #{tpu_custom_call.1} parent=1 // pred_fallthru
      _
    // Predicated region
    $region26: #{tpu_custom_call.1} parent=1 // pred_check
      _
    $region27: #{tpu_custom_call.1} parent=1 // pred_check_branch
      %59 = sbr.rel (0) target = $region29
    $region28: #{tpu_custom_call.1} parent=1 // pred_region
      %61 = dma.done [#allocation7], 16384
    $region29: #{tpu_custom_call.1} parent=1 // pred_fallthru
      _
    // Predicated region
    $region30: #{tpu_custom_call.1} parent=1 // pred_check
      _
    $region31: #{tpu_custom_call.1} parent=1 // pred_check_branch
      %63 = sbr.rel (0) target = $region33
    $region32: #{tpu_custom_call.1} parent=1 // pred_region
      %65 = dma.done [#allocation7], 2048
    $region33: #{tpu_custom_call.1} parent=1 // pred_fallthru
      _
    %p66 = scmp.eq.s32.totalorder 0, 0
    // Predicated region
    $region34: #{tpu_custom_call.1} parent=1 // pred_check
      %p67 = pneg %p66
    $region35: #{tpu_custom_call.1} parent=1 // pred_check_branch
      %69 = sbr.rel (%p67) target = $region37
    $region36: #{tpu_custom_call.1} parent=1 // pred_region
      %v70 = vld [vmem:[%s2] sm:$0x1]
      %v72 = vperm.slane %v70, 0
      %74 = vst [vmem:[#allocation2] sm:$0xff] %v72
    $region37: #{tpu_custom_call.1} parent=1 // pred_fallthru
      _
    %v75 = vld [vmem:[#allocation2] sm:$0xff]
    %v76 = vld [vmem:[#allocation3] sm:$0xff]
    %v77 = vld [vmem:[#allocation3 + $0x8] sm:$0xff]
    %v78 = vld [vmem:[#allocation3 + $0x10] sm:$0xff]
    %v79 = vld [vmem:[#allocation3 + $0x18] sm:$0xff]
    %v80 = vld [vmem:[#allocation3 + $0x20] sm:$0xff]
    %v81 = vld [vmem:[#allocation3 + $0x28] sm:$0xff]
    %v82 = vld [vmem:[#allocation3 + $0x30] sm:$0xff]
    %v83 = vld [vmem:[#allocation3 + $0x38] sm:$0xff]
    %v84 = vld [vmem:[#allocation6] sm:$0xff]
    %v85 = vld [vmem:[#allocation6 + $0x8] sm:$0xff]
    %v86 = vld [vmem:[#allocation6 + $0x10] sm:$0xff]
    %v87 = vld [vmem:[#allocation6 + $0x18] sm:$0xff]
    %v88 = vld [vmem:[#allocation6 + $0x20] sm:$0xff]
    %v89 = vld [vmem:[#allocation6 + $0x28] sm:$0xff]
    %v90 = vld [vmem:[#allocation6 + $0x30] sm:$0xff]
    %v91 = vld [vmem:[#allocation6 + $0x38] sm:$0xff]
    %v92 = vld [vmem:[#allocation6 + $0x40] sm:$0xff]
    %v93 = vld [vmem:[#allocation6 + $0x48] sm:$0xff]
    %v94 = vld [vmem:[#allocation6 + $0x50] sm:$0xff]
    %v95 = vld [vmem:[#allocation6 + $0x58] sm:$0xff]
    %v96 = vld [vmem:[#allocation6 + $0x60] sm:$0xff]
    %v97 = vld [vmem:[#allocation6 + $0x68] sm:$0xff]
    %v98 = vld [vmem:[#allocation6 + $0x70] sm:$0xff]
    %v99 = vld [vmem:[#allocation6 + $0x78] sm:$0xff]
    %v100 = vld [vmem:[#allocation6 + $0x80] sm:$0xff]
    %v101 = vld [vmem:[#allocation6 + $0x88] sm:$0xff]
    %v102 = vld [vmem:[#allocation6 + $0x90] sm:$0xff]
    %v103 = vld [vmem:[#allocation6 + $0x98] sm:$0xff]
    %v104 = vld [vmem:[#allocation6 + $0xa0] sm:$0xff]
    %v105 = vld [vmem:[#allocation6 + $0xa8] sm:$0xff]
    %v106 = vld [vmem:[#allocation6 + $0xb0] sm:$0xff]
    %v107 = vld [vmem:[#allocation6 + $0xb8] sm:$0xff]
    %v108 = vld [vmem:[#allocation6 + $0xc0] sm:$0xff]
    %v109 = vld [vmem:[#allocation6 + $0xc8] sm:$0xff]
    %v110 = vld [vmem:[#allocation6 + $0xd0] sm:$0xff]
    %v111 = vld [vmem:[#allocation6 + $0xd8] sm:$0xff]
    %v112 = vld [vmem:[#allocation6 + $0xe0] sm:$0xff]
    %v113 = vld [vmem:[#allocation6 + $0xe8] sm:$0xff]
    %v114 = vld [vmem:[#allocation6 + $0xf0] sm:$0xff]
    %v115 = vld [vmem:[#allocation6 + $0xf8] sm:$0xff]
    %v116 = vld [vmem:[#allocation6 + $0x100] sm:$0xff]
    %v117 = vld [vmem:[#allocation6 + $0x108] sm:$0xff]
    %v118 = vld [vmem:[#allocation6 + $0x110] sm:$0xff]
    %v119 = vld [vmem:[#allocation6 + $0x118] sm:$0xff]
    %v120 = vld [vmem:[#allocation6 + $0x120] sm:$0xff]
    %v121 = vld [vmem:[#allocation6 + $0x128] sm:$0xff]
    %v122 = vld [vmem:[#allocation6 + $0x130] sm:$0xff]
    %v123 = vld [vmem:[#allocation6 + $0x138] sm:$0xff]
    %v124 = vld [vmem:[#allocation6 + $0x140] sm:$0xff]
    %v125 = vld [vmem:[#allocation6 + $0x148] sm:$0xff]
    %v126 = vld [vmem:[#allocation6 + $0x150] sm:$0xff]
    %v127 = vld [vmem:[#allocation6 + $0x158] sm:$0xff]
    %v128 = vld [vmem:[#allocation6 + $0x160] sm:$0xff]
    %v129 = vld [vmem:[#allocation6 + $0x168] sm:$0xff]
    %v130 = vld [vmem:[#allocation6 + $0x170] sm:$0xff]
    %v131 = vld [vmem:[#allocation6 + $0x178] sm:$0xff]
    %v132 = vld [vmem:[#allocation6 + $0x180] sm:$0xff]
    %v133 = vld [vmem:[#allocation6 + $0x188] sm:$0xff]
    %v134 = vld [vmem:[#allocation6 + $0x190] sm:$0xff]
    %v135 = vld [vmem:[#allocation6 + $0x198] sm:$0xff]
    %v136 = vld [vmem:[#allocation6 + $0x1a0] sm:$0xff]
    %v137 = vld [vmem:[#allocation6 + $0x1a8] sm:$0xff]
    %v138 = vld [vmem:[#allocation6 + $0x1b0] sm:$0xff]
    %v139 = vld [vmem:[#allocation6 + $0x1b8] sm:$0xff]
    %v140 = vld [vmem:[#allocation6 + $0x1c0] sm:$0xff]
    %v141 = vld [vmem:[#allocation6 + $0x1c8] sm:$0xff]
    %v142 = vld [vmem:[#allocation6 + $0x1d0] sm:$0xff]
    %v143 = vld [vmem:[#allocation6 + $0x1d8] sm:$0xff]
    %v144 = vld [vmem:[#allocation6 + $0x1e0] sm:$0xff]
    %v145 = vld [vmem:[#allocation6 + $0x1e8] sm:$0xff]
    %v146 = vld [vmem:[#allocation6 + $0x1f0] sm:$0xff]
    %v147 = vld [vmem:[#allocation6 + $0x1f8] sm:$0xff]
    %v148 = vld [vmem:[#allocation6 + $0x200] sm:$0xff]
    %v149 = vld [vmem:[#allocation6 + $0x208] sm:$0xff]
    %v150 = vld [vmem:[#allocation6 + $0x210] sm:$0xff]
    %v151 = vld [vmem:[#allocation6 + $0x218] sm:$0xff]
    %v152 = vld [vmem:[#allocation6 + $0x220] sm:$0xff]
    %v153 = vld [vmem:[#allocation6 + $0x228] sm:$0xff]
    %v154 = vld [vmem:[#allocation6 + $0x230] sm:$0xff]
    %v155 = vld [vmem:[#allocation6 + $0x238] sm:$0xff]
    %v156 = vld [vmem:[#allocation6 + $0x240] sm:$0xff]
    %v157 = vld [vmem:[#allocation6 + $0x248] sm:$0xff]
    %v158 = vld [vmem:[#allocation6 + $0x250] sm:$0xff]
    %v159 = vld [vmem:[#allocation6 + $0x258] sm:$0xff]
    %v160 = vld [vmem:[#allocation6 + $0x260] sm:$0xff]
    %v161 = vld [vmem:[#allocation6 + $0x268] sm:$0xff]
    %v162 = vld [vmem:[#allocation6 + $0x270] sm:$0xff]
    %v163 = vld [vmem:[#allocation6 + $0x278] sm:$0xff]
    %v164 = vld [vmem:[#allocation6 + $0x280] sm:$0xff]
    %v165 = vld [vmem:[#allocation6 + $0x288] sm:$0xff]
    %v166 = vld [vmem:[#allocation6 + $0x290] sm:$0xff]
    %v167 = vld [vmem:[#allocation6 + $0x298] sm:$0xff]
    %v168 = vld [vmem:[#allocation6 + $0x2a0] sm:$0xff]
    %v169 = vld [vmem:[#allocation6 + $0x2a8] sm:$0xff]
    %v170 = vld [vmem:[#allocation6 + $0x2b0] sm:$0xff]
    %v171 = vld [vmem:[#allocation6 + $0x2b8] sm:$0xff]
    %v172 = vld [vmem:[#allocation6 + $0x2c0] sm:$0xff]
    %v173 = vld [vmem:[#allocation6 + $0x2c8] sm:$0xff]
    %v174 = vld [vmem:[#allocation6 + $0x2d0] sm:$0xff]
    %v175 = vld [vmem:[#allocation6 + $0x2d8] sm:$0xff]
    %v176 = vld [vmem:[#allocation6 + $0x2e0] sm:$0xff]
    %v177 = vld [vmem:[#allocation6 + $0x2e8] sm:$0xff]
    %v178 = vld [vmem:[#allocation6 + $0x2f0] sm:$0xff]
    %v179 = vld [vmem:[#allocation6 + $0x2f8] sm:$0xff]
    %v180 = vld [vmem:[#allocation6 + $0x300] sm:$0xff]
    %v181 = vld [vmem:[#allocation6 + $0x308] sm:$0xff]
    %v182 = vld [vmem:[#allocation6 + $0x310] sm:$0xff]
    %v183 = vld [vmem:[#allocation6 + $0x318] sm:$0xff]
    %v184 = vld [vmem:[#allocation6 + $0x320] sm:$0xff]
    %v185 = vld [vmem:[#allocation6 + $0x328] sm:$0xff]
    %v186 = vld [vmem:[#allocation6 + $0x330] sm:$0xff]
    %v187 = vld [vmem:[#allocation6 + $0x338] sm:$0xff]
    %v188 = vld [vmem:[#allocation6 + $0x340] sm:$0xff]
    %v189 = vld [vmem:[#allocation6 + $0x348] sm:$0xff]
    %v190 = vld [vmem:[#allocation6 + $0x350] sm:$0xff]
    %v191 = vld [vmem:[#allocation6 + $0x358] sm:$0xff]
    %v192 = vld [vmem:[#allocation6 + $0x360] sm:$0xff]
    %v193 = vld [vmem:[#allocation6 + $0x368] sm:$0xff]
    %v194 = vld [vmem:[#allocation6 + $0x370] sm:$0xff]
    %v195 = vld [vmem:[#allocation6 + $0x378] sm:$0xff]
    %v196 = vld [vmem:[#allocation6 + $0x380] sm:$0xff]
    %v197 = vld [vmem:[#allocation6 + $0x388] sm:$0xff]
    %v198 = vld [vmem:[#allocation6 + $0x390] sm:$0xff]
    %v199 = vld [vmem:[#allocation6 + $0x398] sm:$0xff]
    %v200 = vld [vmem:[#allocation6 + $0x3a0] sm:$0xff]
    %v201 = vld [vmem:[#allocation6 + $0x3a8] sm:$0xff]
    %v202 = vld [vmem:[#allocation6 + $0x3b0] sm:$0xff]
    %v203 = vld [vmem:[#allocation6 + $0x3b8] sm:$0xff]
    %v204 = vld [vmem:[#allocation6 + $0x3c0] sm:$0xff]
    %v205 = vld [vmem:[#allocation6 + $0x3c8] sm:$0xff]
    %v206 = vld [vmem:[#allocation6 + $0x3d0] sm:$0xff]
    %v207 = vld [vmem:[#allocation6 + $0x3d8] sm:$0xff]
    %v208 = vld [vmem:[#allocation6 + $0x3e0] sm:$0xff]
    %v209 = vld [vmem:[#allocation6 + $0x3e8] sm:$0xff]
    %v210 = vld [vmem:[#allocation6 + $0x3f0] sm:$0xff]
    %v211 = vld [vmem:[#allocation6 + $0x3f8] sm:$0xff]
    %212 = vmatpush.msra.mxu0 %v99
    %213 = vmatpush.msra.mxu0 %v98
    %214 = vmatpush.msra.mxu0 %v97
    %215 = vmatpush.msra.mxu0 %v96
    %216 = vmatpush.msra.mxu0 %v95
    %217 = vmatpush.msra.mxu0 %v94
    %218 = vmatpush.msra.mxu0 %v93
    %219 = vmatpush.msra.mxu0 %v92
    %220 = vmatpush.msra.mxu0 %v91
    %221 = vmatpush.msra.mxu0 %v90
    %222 = vmatpush.msra.mxu0 %v89
    %223 = vmatpush.msra.mxu0 %v88
    %224 = vmatpush.msra.mxu0 %v87
    %225 = vmatpush.msra.mxu0 %v86
    %226 = vmatpush.msra.mxu0 %v85
    %227 = vmatpush.msra.mxu0 %v84
    %228 = vmatmul.f32.gmra.mxu0 %v76
    %v229 = vpop.f32.mrf.mxu0
    %v230 = vadd.f32 0.0, %v229
    %231 = vdwg.mxu0
    %232 = vmatpush.msra.mxu0 %v115
    %233 = vmatpush.msra.mxu0 %v114
    %234 = vmatpush.msra.mxu0 %v113
    %235 = vmatpush.msra.mxu0 %v112
    %236 = vmatpush.msra.mxu0 %v111
    %237 = vmatpush.msra.mxu0 %v110
    %238 = vmatpush.msra.mxu0 %v109
    %239 = vmatpush.msra.mxu0 %v108
    %240 = vmatpush.msra.mxu0 %v107
    %241 = vmatpush.msra.mxu0 %v106
    %242 = vmatpush.msra.mxu0 %v105
    %243 = vmatpush.msra.mxu0 %v104
    %244 = vmatpush.msra.mxu0 %v103
    %245 = vmatpush.msra.mxu0 %v102
    %246 = vmatpush.msra.mxu0 %v101
    %247 = vmatpush.msra.mxu0 %v100
    %248 = vmatmul.f32.gmra.mxu0 %v77
    %v249 = vpop.f32.mrf.mxu0
    %v250 = vadd.f32 %v230, %v249
    %251 = vdwg.mxu0
    %252 = vmatpush.msra.mxu0 %v131
    %253 = vmatpush.msra.mxu0 %v130
    %254 = vmatpush.msra.mxu0 %v129
    %255 = vmatpush.msra.mxu0 %v128
    %256 = vmatpush.msra.mxu0 %v127
    %257 = vmatpush.msra.mxu0 %v126
    %258 = vmatpush.msra.mxu0 %v125
    %259 = vmatpush.msra.mxu0 %v124
    %260 = vmatpush.msra.mxu0 %v123
    %261 = vmatpush.msra.mxu0 %v122
    %262 = vmatpush.msra.mxu0 %v121
    %263 = vmatpush.msra.mxu0 %v120
    %264 = vmatpush.msra.mxu0 %v119
    %265 = vmatpush.msra.mxu0 %v118
    %266 = vmatpush.msra.mxu0 %v117
    %267 = vmatpush.msra.mxu0 %v116
    %268 = vmatmul.f32.gmra.mxu0 %v78
    %v269 = vpop.f32.mrf.mxu0
    %v270 = vadd.f32 %v250, %v269
    %271 = vdwg.mxu0
    %272 = vmatpush.msra.mxu0 %v147
    %273 = vmatpush.msra.mxu0 %v146
    %274 = vmatpush.msra.mxu0 %v145
    %275 = vmatpush.msra.mxu0 %v144
    %276 = vmatpush.msra.mxu0 %v143
    %277 = vmatpush.msra.mxu0 %v142
    %278 = vmatpush.msra.mxu0 %v141
    %279 = vmatpush.msra.mxu0 %v140
    %280 = vmatpush.msra.mxu0 %v139
    %281 = vmatpush.msra.mxu0 %v138
    %282 = vmatpush.msra.mxu0 %v137
    %283 = vmatpush.msra.mxu0 %v136
    %284 = vmatpush.msra.mxu0 %v135
    %285 = vmatpush.msra.mxu0 %v134
    %286 = vmatpush.msra.mxu0 %v133
    %287 = vmatpush.msra.mxu0 %v132
    %288 = vmatmul.f32.gmra.mxu0 %v79
    %v289 = vpop.f32.mrf.mxu0
    %v290 = vadd.f32 %v270, %v289
    %291 = vdwg.mxu0
    %292 = vmatpush.msra.mxu0 %v163
    %293 = vmatpush.msra.mxu0 %v162
    %294 = vmatpush.msra.mxu0 %v161
    %295 = vmatpush.msra.mxu0 %v160
    %296 = vmatpush.msra.mxu0 %v159
    %297 = vmatpush.msra.mxu0 %v158
    %298 = vmatpush.msra.mxu0 %v157
    %299 = vmatpush.msra.mxu0 %v156
    %300 = vmatpush.msra.mxu0 %v155
    %301 = vmatpush.msra.mxu0 %v154
    %302 = vmatpush.msra.mxu0 %v153
    %303 = vmatpush.msra.mxu0 %v152
    %304 = vmatpush.msra.mxu0 %v151
    %305 = vmatpush.msra.mxu0 %v150
    %306 = vmatpush.msra.mxu0 %v149
    %307 = vmatpush.msra.mxu0 %v148
    %308 = vmatmul.f32.gmra.mxu0 %v80
    %v309 = vpop.f32.mrf.mxu0
    %v310 = vadd.f32 %v290, %v309
    %311 = vdwg.mxu0
    %312 = vmatpush.msra.mxu0 %v179
    %313 = vmatpush.msra.mxu0 %v178
    %314 = vmatpush.msra.mxu0 %v177
    %315 = vmatpush.msra.mxu0 %v176
    %316 = vmatpush.msra.mxu0 %v175
    %317 = vmatpush.msra.mxu0 %v174
    %318 = vmatpush.msra.mxu0 %v173
    %319 = vmatpush.msra.mxu0 %v172
    %320 = vmatpush.msra.mxu0 %v171
    %321 = vmatpush.msra.mxu0 %v170
    %322 = vmatpush.msra.mxu0 %v169
    %323 = vmatpush.msra.mxu0 %v168
    %324 = vmatpush.msra.mxu0 %v167
    %325 = vmatpush.msra.mxu0 %v166
    %326 = vmatpush.msra.mxu0 %v165
    %327 = vmatpush.msra.mxu0 %v164
    %328 = vmatmul.f32.gmra.mxu0 %v81
    %v329 = vpop.f32.mrf.mxu0
    %v330 = vadd.f32 %v310, %v329
    %331 = vdwg.mxu0
    %332 = vmatpush.msra.mxu0 %v195
    %333 = vmatpush.msra.mxu0 %v194
    %334 = vmatpush.msra.mxu0 %v193
    %335 = vmatpush.msra.mxu0 %v192
    %336 = vmatpush.msra.mxu0 %v191
    %337 = vmatpush.msra.mxu0 %v190
    %338 = vmatpush.msra.mxu0 %v189
    %339 = vmatpush.msra.mxu0 %v188
    %340 = vmatpush.msra.mxu0 %v187
    %341 = vmatpush.msra.mxu0 %v186
    %342 = vmatpush.msra.mxu0 %v185
    %343 = vmatpush.msra.mxu0 %v184
    %344 = vmatpush.msra.mxu0 %v183
    %345 = vmatpush.msra.mxu0 %v182
    %346 = vmatpush.msra.mxu0 %v181
    %347 = vmatpush.msra.mxu0 %v180
    %348 = vmatmul.f32.gmra.mxu0 %v82
    %v349 = vpop.f32.mrf.mxu0
    %v350 = vadd.f32 %v330, %v349
    %351 = vdwg.mxu0
    %352 = vmatpush.msra.mxu0 %v211
    %353 = vmatpush.msra.mxu0 %v210
    %354 = vmatpush.msra.mxu0 %v209
    %355 = vmatpush.msra.mxu0 %v208
    %356 = vmatpush.msra.mxu0 %v207
    %357 = vmatpush.msra.mxu0 %v206
    %358 = vmatpush.msra.mxu0 %v205
    %359 = vmatpush.msra.mxu0 %v204
    %360 = vmatpush.msra.mxu0 %v203
    %361 = vmatpush.msra.mxu0 %v202
    %362 = vmatpush.msra.mxu0 %v201
    %363 = vmatpush.msra.mxu0 %v200
    %364 = vmatpush.msra.mxu0 %v199
    %365 = vmatpush.msra.mxu0 %v198
    %366 = vmatpush.msra.mxu0 %v197
    %367 = vmatpush.msra.mxu0 %v196
    %368 = vmatmul.f32.gmra.mxu0 %v83
    %v369 = vpop.f32.mrf.mxu0
    %v370 = vadd.f32 %v350, %v369
    %371 = vdwg.mxu0
    %v372 = vadd.f32 %v75, %v370
    %373 = vst [vmem:[#allocation2] sm:$0xff] %v372
    // Predicated region
    $region38: #{tpu_custom_call.1} parent=1 // pred_check
      %p374 = pneg %p66
    $region39: #{tpu_custom_call.1} parent=1 // pred_check_branch
      %376 = sbr.rel (%p374) target = $region41
    $region40: #{tpu_custom_call.1} parent=1 // pred_region
      %v377 = vld [vmem:[#allocation2] sm:$0xff]
      %v378 = vmax.f32 %v377, 0.0
      %v379 = vld [vmem:[#allocation8] sm:$0xff]
      %v380 = vld [vmem:[#allocation8 + $0x8] sm:$0xff]
      %v381 = vld [vmem:[#allocation8 + $0x10] sm:$0xff]
      %v382 = vld [vmem:[#allocation8 + $0x18] sm:$0xff]
      %v383 = vld [vmem:[#allocation8 + $0x20] sm:$0xff]
      %v384 = vld [vmem:[#allocation8 + $0x28] sm:$0xff]
      %v385 = vld [vmem:[#allocation8 + $0x30] sm:$0xff]
      %v386 = vld [vmem:[#allocation8 + $0x38] sm:$0xff]
      %v387 = vld [vmem:[#allocation8 + $0x40] sm:$0xff]
      %v388 = vld [vmem:[#allocation8 + $0x48] sm:$0xff]
      %v389 = vld [vmem:[#allocation8 + $0x50] sm:$0xff]
      %v390 = vld [vmem:[#allocation8 + $0x58] sm:$0xff]
      %v391 = vld [vmem:[#allocation8 + $0x60] sm:$0xff]
      %v392 = vld [vmem:[#allocation8 + $0x68] sm:$0xff]
      %v393 = vld [vmem:[#allocation8 + $0x70] sm:$0xff]
      %v394 = vld [vmem:[#allocation8 + $0x78] sm:$0xff]
      %v395 = vld [vmem:[%s4] sm:$0x1]
      %v397 = vperm.slane %v395, 0
      %399 = vmatpush.msra.mxu0 %v394
      %400 = vmatpush.msra.mxu0 %v393
      %401 = vmatpush.msra.mxu0 %v392
      %402 = vmatpush.msra.mxu0 %v391
      %403 = vmatpush.msra.mxu0 %v390
      %404 = vmatpush.msra.mxu0 %v389
      %405 = vmatpush.msra.mxu0 %v388
      %406 = vmatpush.msra.mxu0 %v387
      %407 = vmatpush.msra.mxu0 %v386
      %408 = vmatpush.msra.mxu0 %v385
      %409 = vmatpush.msra.mxu0 %v384
      %410 = vmatpush.msra.mxu0 %v383
      %411 = vmatpush.msra.mxu0 %v382
      %412 = vmatpush.msra.mxu0 %v381
      %413 = vmatpush.msra.mxu0 %v380
      %414 = vmatpush.msra.mxu0 %v379
      %415 = vmatmul.f32.gmra.mxu0 %v378
      %v416 = vpop.f32.mrf.mxu0
      %v417 = vadd.f32 %v397, %v416
      %418 = vdwg.mxu0
      %419 = vst [vmem:[#allocation9] sm:$0xff] %v417
    $region41: #{tpu_custom_call.1} parent=1 // pred_fallthru
      _
    // Predicated region
    $region42: #{tpu_custom_call.1} parent=1 // pred_check
      _
    $region43: #{tpu_custom_call.1} parent=1 // pred_check_branch
      %421 = sbr.rel (0) target = $region45
    $region44: #{tpu_custom_call.1} parent=1 // pred_region
      %423 = vsyncadd [#allocation5], 0
      %s425 = sshll.u32 [#allocation9], 4
      %s426 = int_to_ptr.vmem [resolvable:$true] %s425
      %s427 = sshll.u32 %s5, 4
      %s428 = int_to_ptr.hbm [resolvable:$true] %s427
      %430 = dma.vmem_to_hbm [thread:$0]  %s426, 128, %s428, [#allocation5]
    $region45: #{tpu_custom_call.1} parent=1 // pred_fallthru
      _
    // Predicated region
    $region46: #{tpu_custom_call.1} parent=1 // pred_check
      _
    $region47: #{tpu_custom_call.1} parent=1 // pred_check_branch
      %432 = sbr.rel (0) target = $region49
    $region48: #{tpu_custom_call.1} parent=1 // pred_region
      %434 = dma.done [#allocation5], 128
    $region49: #{tpu_custom_call.1} parent=1 // pred_fallthru
      _
    %435 = vsyncpa [#allocation4], 1
    %436 = vsyncpa [#allocation7], 1
    %437 = vsyncpa [#allocation5], 1

</llo_original>
